<compile_context>
chip_gen: v6e
topology: v6e:2x2x1
jax: 0.10.0
libtpu: 0.0.40
codegen_flags: <defaults>
</compile_context>

<pallas_src>
import jax
import jax.numpy as jnp
from jax.experimental import pallas as pl
from jax.experimental.pallas import tpu as pltpu


def _catenet_kernel(x_ref, w1_ref, b1_ref, w2_ref, b2_ref, w3_ref, b3_ref,
                    o_ref):
    # Layer 1: bf16 MXU matmul, f32 accumulate; bias + ReLU in f32 on the VPU.
    h1 = jnp.dot(x_ref[...], w1_ref[...],
                 preferred_element_type=jnp.float32)
    h1 = jnp.maximum(h1 + b1_ref[...], 0.0)

    # Layer 2: cast the activation to bf16 for the MXU, accumulate in f32.
    h2 = jnp.dot(h1.astype(jnp.bfloat16), w2_ref[...],
                 preferred_element_type=jnp.float32)
    h2 = jnp.maximum(h2 + b2_ref[...], 0.0)

    # Layer 3 (N=1): VPU multiply + lane reduction instead of an MXU pass.
    # w3_ref is the weight column stored as a (1, 32) row; broadcast-multiply
    # against h2 (bt, 32) and reduce along lanes.
    out = jnp.sum(h2 * w3_ref[...], axis=-1, keepdims=True) + b3_ref[...]
    o_ref[...] = out.astype(o_ref.dtype)


def _pick_batch_tile(B):
    # Prefer a tile large enough to hide per-step overhead but small enough
    # to double-buffer comfortably (v7x has only 64 MiB of VMEM).  Fall back
    # to the full batch when nothing divides evenly (still correct, just a
    # single grid step).
    for cand in (1024, 512, 256, 128):
        if B % cand == 0:
            return cand
    return B


def catenet_forward(x, params, *, batch_tile=None):
    """Fused MLP forward:  Linear-ReLU-Linear-ReLU-Linear.

    x:      (B, input_dim) float32
    params: dict with w1 (D,64), b1 (1,64), w2 (64,32), b2 (1,32),
            w3 (32,1), b3 (1,1)   (all float32)
    returns (B, 1) float32
    """
    B, D = x.shape
    if batch_tile is None:
        batch_tile = _pick_batch_tile(B)

    # Sublane tiling rule: the batch dim of each block must be a multiple of
    # 8 unless it spans the whole array.  (D rides the lane axis and is
    # always taken in full.)
    assert B % batch_tile == 0, "batch must be divisible by batch_tile"
    assert batch_tile == B or batch_tile % 8 == 0, \
        "batch_tile must be a multiple of 8 (or equal to the full batch)"

    w1, b1 = params["w1"], params["b1"]
    w2, b2 = params["w2"], params["b2"]
    w3, b3 = params["w3"], params["b3"]

    H1 = w1.shape[1]   # 64
    H2 = w2.shape[1]   # 32

    # bf16 for the MXU operands; biases and the tiny layer-3 weight stay f32
    # (layer 3 runs on the VPU, and v5e's VPU has no bf16).
    x_bf16 = x.astype(jnp.bfloat16)
    w1_bf16 = w1.astype(jnp.bfloat16)
    w2_bf16 = w2.astype(jnp.bfloat16)
    b1_f32 = b1.astype(jnp.float32)
    b2_f32 = b2.astype(jnp.float32)
    w3_row = jnp.reshape(w3, (1, H2)).astype(jnp.float32)   # (1, 32)
    b3_f32 = jnp.reshape(b3, (1, 1)).astype(jnp.float32)

    grid = (B // batch_tile,)

    weight_bytes = (D * H1 + H1 * H2) * 2 + (H1 + 2 * H2 + 1) * 4
    # Double-buffered x tile + out tile + weights, plus headroom for the f32
    # intermediates.  Keep the scoped-VMEM request modest (<= 64 MiB) so it
    # is also valid on v7x.
    vmem_est = (2 * batch_tile * D * 2
                + 2 * batch_tile * 4
                + 2 * weight_bytes
                + batch_tile * (H1 + H2) * 4)
    vmem_limit = int(min(max(vmem_est * 2 + (4 << 20), 32 << 20), 64 << 20))

    cost = pl.CostEstimate(
        flops=2 * B * (D * H1 + H1 * H2 + H2),
        transcendentals=0,
        bytes_accessed=B * D * 2 + weight_bytes + B * 4,
    )

    full = lambda shape: pl.BlockSpec(shape, lambda i: (0, 0))

    return pl.pallas_call(
        _catenet_kernel,
        out_shape=jax.ShapeDtypeStruct((B, 1), jnp.float32),
        grid=grid,
        in_specs=[
            pl.BlockSpec((batch_tile, D), lambda i: (i, 0)),   # x tile (bf16)
            full((D, H1)), full((1, H1)),                      # layer 1
            full((H1, H2)), full((1, H2)),                     # layer 2
            full((1, H2)), full((1, 1)),                       # layer 3
        ],
        out_specs=pl.BlockSpec((batch_tile, 1), lambda i: (i, 0)),
        compiler_params=pltpu.CompilerParams(
            dimension_semantics=("parallel",),
            vmem_limit_bytes=vmem_limit),
        cost_estimate=cost,
    )(x_bf16, w1_bf16, b1_f32, w2_bf16, b2_f32, w3_row, b3_f32)


def init_catenet_params(key, input_dim):
    """Deterministic init matching PyTorch nn.Linear default
    (uniform(-1/sqrt(fan_in), 1/sqrt(fan_in)) for weights and biases)."""
    def linear(key, fan_in, fan_out):
        kw, kb = jax.random.split(key)
        bound = 1.0 / jnp.sqrt(fan_in)
        w = jax.random.uniform(kw, (fan_in, fan_out), jnp.float32,
                               -bound, bound)
        b = jax.random.uniform(kb, (1, fan_out), jnp.float32, -bound, bound)
        return w, b

    k1, k2, k3 = jax.random.split(key, 3)
    w1, b1 = linear(k1, input_dim, 64)
    w2, b2 = linear(k2, 64, 32)
    w3, b3 = linear(k3, 32, 1)
    return {"w1": w1, "b1": b1, "w2": w2, "b2": b2, "w3": w3, "b3": b3}


def catenet_reference_f32(x, params):
    """Pure-JAX f32 reference (exact PyTorch eval-mode semantics)."""
    h = jnp.maximum(x @ params["w1"] + params["b1"], 0.0)
    h = jnp.maximum(h @ params["w2"] + params["b2"], 0.0)
    return h @ params["w3"] + params["b3"]


def catenet_reference_bf16(x, params):
    """Pure-JAX reference mimicking the kernel's bf16 MXU inputs."""
    f32 = jnp.float32
    h = jnp.dot(x.astype(jnp.bfloat16), params["w1"].astype(jnp.bfloat16),
                preferred_element_type=f32) + params["b1"]
    h = jnp.maximum(h, 0.0)
    h = jnp.dot(h.astype(jnp.bfloat16), params["w2"].astype(jnp.bfloat16),
                preferred_element_type=f32) + params["b2"]
    h = jnp.maximum(h, 0.0)
    return h @ params["w3"] + params["b3"]


if __name__ == "__main__":
    key = jax.random.PRNGKey(0)
    k_param, k_x = jax.random.split(key)

    batch, input_dim = 512, 32
    x = jax.random.normal(k_x, (batch, input_dim), jnp.float32)
    params = init_catenet_params(k_param, input_dim)

    # Multi-step grid path (4 tiles of 128 rows): pipelined, megacore-friendly.
    out = catenet_forward(x, params, batch_tile=128)
    out = jax.block_until_ready(out)
    assert out.shape == (batch, 1)

    ref_bf16 = catenet_reference_bf16(x, params)
    ref_f32 = catenet_reference_f32(x, params)
    assert jnp.allclose(out, ref_bf16, atol=1e-3, rtol=1e-3), \
        "mismatch vs bf16-input reference"
    assert jnp.allclose(out, ref_f32, atol=5e-2, rtol=5e-2), \
        "mismatch vs f32 reference"

    # Small-batch path (single grid step, tile == full batch).
    x_small = x[:8]
    out_small = jax.block_until_ready(catenet_forward(x_small, params))
    assert out_small.shape == (8, 1)
    assert jnp.allclose(out_small, ref_bf16[:8], atol=1e-3, rtol=1e-3), \
        "mismatch vs reference (small batch)"

    print("KERNEL_OK")
</pallas_src>

<mosaic_0001>
module attributes {stable_mosaic.version = 11 : i64} {
  func.func @_catenet_kernel(%arg0: i32, %arg1: memref<128x32xbf16, #tpu.memory_space<vmem>>, %arg2: memref<32x64xbf16, #tpu.memory_space<vmem>>, %arg3: memref<1x64xf32, #tpu.memory_space<vmem>>, %arg4: memref<64x32xbf16, #tpu.memory_space<vmem>>, %arg5: memref<1x32xf32, #tpu.memory_space<vmem>>, %arg6: memref<1x32xf32, #tpu.memory_space<vmem>>, %arg7: memref<1x1xf32, #tpu.memory_space<vmem>>, %arg8: memref<128x1xf32, #tpu.memory_space<vmem>>) attributes {dimension_semantics = [#tpu.dimension_semantics<parallel>], iteration_bounds = array<i64: 4>, scalar_prefetch = 0 : i64, scratch_operands = 0 : i64, tpu.core_type = #tpu.core_type<tc>, window_params = [{transform_indices = @transform_0, window_bounds = array<i64: 128, 32>}, {pipeline_mode = #tpu.pipeline_mode<synchronous>, transform_indices = @transform_1, window_bounds = array<i64: 32, 64>}, {pipeline_mode = #tpu.pipeline_mode<synchronous>, transform_indices = @transform_2, window_bounds = array<i64: 1, 64>}, {pipeline_mode = #tpu.pipeline_mode<synchronous>, transform_indices = @transform_3, window_bounds = array<i64: 64, 32>}, {pipeline_mode = #tpu.pipeline_mode<synchronous>, transform_indices = @transform_4, window_bounds = array<i64: 1, 32>}, {pipeline_mode = #tpu.pipeline_mode<synchronous>, transform_indices = @transform_5, window_bounds = array<i64: 1, 32>}, {pipeline_mode = #tpu.pipeline_mode<synchronous>, transform_indices = @transform_6, window_bounds = array<i64: 1, 1>}, {transform_indices = @transform_7, window_bounds = array<i64: 128, 1>}]} {
    %c0 = arith.constant 0 : index
    %c0_0 = arith.constant 0 : index
    %0 = vector.load %arg1[%c0, %c0_0] : memref<128x32xbf16, #tpu.memory_space<vmem>>, vector<128x32xbf16>
    %c0_1 = arith.constant 0 : index
    %c0_2 = arith.constant 0 : index
    %1 = vector.load %arg2[%c0_1, %c0_2] : memref<32x64xbf16, #tpu.memory_space<vmem>>, vector<32x64xbf16>
    %cst = arith.constant dense<0.000000e+00> : vector<128x64xf32>
    %2 = tpu.matmul %0, %1, %cst {dimension_numbers = #tpu.dot_dimension_numbers<[1], [0], [0], [1], [0, 0, 1, 1], [], []>} : vector<128x32xbf16>, vector<32x64xbf16>, vector<128x64xf32> -> vector<128x64xf32>
    %c0_3 = arith.constant 0 : index
    %c0_4 = arith.constant 0 : index
    %3 = vector.load %arg3[%c0_3, %c0_4] : memref<1x64xf32, #tpu.memory_space<vmem>>, vector<1x64xf32>
    %4 = vector.broadcast %3 : vector<1x64xf32> to vector<128x64xf32>
    %5 = arith.addf %2, %4 : vector<128x64xf32>
    %cst_5 = arith.constant 0.000000e+00 : f32
    %6 = vector.broadcast %cst_5 : f32 to vector<128x64xf32>
    %7 = arith.maximumf %5, %6 : vector<128x64xf32>
    %8 = arith.truncf %7 : vector<128x64xf32> to vector<128x64xbf16>
    %c0_6 = arith.constant 0 : index
    %c0_7 = arith.constant 0 : index
    %9 = vector.load %arg4[%c0_6, %c0_7] : memref<64x32xbf16, #tpu.memory_space<vmem>>, vector<64x32xbf16>
    %cst_8 = arith.constant dense<0.000000e+00> : vector<128x32xf32>
    %10 = tpu.matmul %8, %9, %cst_8 {dimension_numbers = #tpu.dot_dimension_numbers<[1], [0], [0], [1], [0, 0, 1, 1], [], []>} : vector<128x64xbf16>, vector<64x32xbf16>, vector<128x32xf32> -> vector<128x32xf32>
    %c0_9 = arith.constant 0 : index
    %c0_10 = arith.constant 0 : index
    %11 = vector.load %arg5[%c0_9, %c0_10] : memref<1x32xf32, #tpu.memory_space<vmem>>, vector<1x32xf32>
    %12 = vector.broadcast %11 : vector<1x32xf32> to vector<128x32xf32>
    %13 = arith.addf %10, %12 : vector<128x32xf32>
    %cst_11 = arith.constant 0.000000e+00 : f32
    %14 = vector.broadcast %cst_11 : f32 to vector<128x32xf32>
    %15 = arith.maximumf %13, %14 : vector<128x32xf32>
    %c0_12 = arith.constant 0 : index
    %c0_13 = arith.constant 0 : index
    %16 = vector.load %arg6[%c0_12, %c0_13] : memref<1x32xf32, #tpu.memory_space<vmem>>, vector<1x32xf32>
    %17 = vector.broadcast %16 : vector<1x32xf32> to vector<128x32xf32>
    %18 = arith.mulf %15, %17 : vector<128x32xf32>
    %cst_14 = arith.constant dense<0.000000e+00> : vector<128xf32>
    %19 = vector.multi_reduction <add>, %18, %cst_14 [1] : vector<128x32xf32> to vector<128xf32>
    %20 = vector.shape_cast %19 : vector<128xf32> to vector<128x1xf32>
    %c0_15 = arith.constant 0 : index
    %c0_16 = arith.constant 0 : index
    %21 = vector.load %arg7[%c0_15, %c0_16] : memref<1x1xf32, #tpu.memory_space<vmem>>, vector<1x1xf32>
    %22 = vector.broadcast %21 : vector<1x1xf32> to vector<128x1xf32>
    %23 = arith.addf %20, %22 : vector<128x1xf32>
    %c0_17 = arith.constant 0 : index
    %c0_18 = arith.constant 0 : index
    %24 = vector.load %arg8[%c0_17, %c0_18] : memref<128x1xf32, #tpu.memory_space<vmem>>, vector<128x1xf32>
    tpu.vector_store %arg8[%c0_17, %c0_18], %23 {strides = array<i32>} : memref<128x1xf32, #tpu.memory_space<vmem>>, vector<128x1xf32>,
    return
  }
  func.func @transform_0(%arg0: i32) -> (i32, i32) {
    %c0_i32 = arith.constant 0 : i32
    %c0_i32_0 = arith.constant 0 : i32
    return %arg0, %c0_i32 : i32, i32
  }
  func.func @transform_1(%arg0: i32) -> (i32, i32) {
    %c0_i32 = arith.constant 0 : i32
    %c0_i32_0 = arith.constant 0 : i32
    %c0_i32_1 = arith.constant 0 : i32
    return %c0_i32, %c0_i32_0 : i32, i32
  }
  func.func @transform_2(%arg0: i32) -> (i32, i32) {
    %c0_i32 = arith.constant 0 : i32
    %c0_i32_0 = arith.constant 0 : i32
    %c0_i32_1 = arith.constant 0 : i32
    return %c0_i32, %c0_i32_0 : i32, i32
  }
  func.func @transform_3(%arg0: i32) -> (i32, i32) {
    %c0_i32 = arith.constant 0 : i32
    %c0_i32_0 = arith.constant 0 : i32
    %c0_i32_1 = arith.constant 0 : i32
    return %c0_i32, %c0_i32_0 : i32, i32
  }
  func.func @transform_4(%arg0: i32) -> (i32, i32) {
    %c0_i32 = arith.constant 0 : i32
    %c0_i32_0 = arith.constant 0 : i32
    %c0_i32_1 = arith.constant 0 : i32
    return %c0_i32, %c0_i32_0 : i32, i32
  }
  func.func @transform_5(%arg0: i32) -> (i32, i32) {
    %c0_i32 = arith.constant 0 : i32
    %c0_i32_0 = arith.constant 0 : i32
    %c0_i32_1 = arith.constant 0 : i32
    return %c0_i32, %c0_i32_0 : i32, i32
  }
  func.func @transform_6(%arg0: i32) -> (i32, i32) {
    %c0_i32 = arith.constant 0 : i32
    %c0_i32_0 = arith.constant 0 : i32
    %c0_i32_1 = arith.constant 0 : i32
    return %c0_i32, %c0_i32_0 : i32, i32
  }
  func.func @transform_7(%arg0: i32) -> (i32, i32) {
    %c0_i32 = arith.constant 0 : i32
    %c0_i32_0 = arith.constant 0 : i32
    return %arg0, %c0_i32 : i32, i32
  }
}

</mosaic_0001>

<llo_original>
// kernel: tpu_custom_call.1
$region0: #{tpu_custom_call.1}
  #allocation0 [shape = 'u32[]', space=smem, size = 0x4, offset = 0x4, fixed_abs, tag = 'smem constant byte address 0x4 - core index']
  #allocation1 [shape = 'u32[144,128]{1,0:T(1,128)}', space=vmem, size = 0x12000, scoped, tag = 'internal scratch']
  #allocation2 [shape = 'f32[1,1]{1,0:T(1,128)S(1)}', space=vmem, size = 0x200, scoped, tag = 'scoped memory for tpu_custom_call.1']
  %s0 = inlined_call_operand.vmem [shape: bf16[512,32], index: 0, kind: input, shape index: {}]
  %s1 = inlined_call_operand.vmem [shape: bf16[32,64], index: 1, kind: input, shape index: {}]
  %s2 = inlined_call_operand.vmem [shape: f32[1,64], index: 2, kind: input, shape index: {}]
  %s3 = inlined_call_operand.vmem [shape: bf16[64,32], index: 3, kind: input, shape index: {}]
  %s4 = inlined_call_operand.vmem [shape: f32[1,32], index: 4, kind: input, shape index: {}]
  %s5 = inlined_call_operand.vmem [shape: f32[1,32], index: 5, kind: input, shape index: {}]
  %s6 = inlined_call_operand.<no memory space> [shape: f32[1,1], index: 6, kind: input, shape index: {}]
  %s7 = inlined_call_operand.vmem [shape: f32[512,1], index: 7, kind: output, shape index: {}]
  %s8 = sld [smem:[#allocation0]]
  $region61: #{tpu_custom_call.1} parent=0
    _
  %s10 = ssub.s32 1, %s8
  %s11 = scalar_select 0, %s10, %s8
  %v12 = vstv %s6
  %13 = vst [vmem:[#allocation2] sm:$0x1] %v12
  loop: start=0, step=1, limit=6
  $region2: #{tpu_custom_call.1} parent=0 // loop_pre_header
    _
  $region3: #{tpu_custom_call.1} parent=0 // loop_header
    %s15 = sphi 0, %s19
    %p16 = scmp.ge.s32.totalorder %s15, 6
    %s25 = sphi 0, %s27
    %s28 = sphi 0, %s25
    %s29 = sphi 0, %s28
    %s45 = sphi 0, %s29
    %s49 = sphi 0, %s49
    %s51 = sphi 0, %s49
    %s52 = sphi 0, %s51
    %s66 = sphi 0, %s52
    %s70 = sphi 0, %s70
    %s72 = sphi 0, %s70
    %s73 = sphi 0, %s72
    %s87 = sphi 0, %s73
    %s91 = sphi 0, %s91
    %s93 = sphi 0, %s91
    %s94 = sphi 0, %s93
    %s108 = sphi 0, %s94
    %s112 = sphi 0, %s112
    %s114 = sphi 0, %s112
    %s115 = sphi 0, %s114
    %s129 = sphi 0, %s115
    %s133 = sphi 0, %s133
    %s135 = sphi 0, %s133
    %s136 = sphi 0, %s135
    %s150 = sphi 0, %s136
    %s154 = sphi 0, %s154
    %s156 = sphi 0, %s154
    %s157 = sphi 0, %s156
    %s171 = sphi 0, %s157
    %s177 = sphi 0, %s179
    %s180 = sphi 0, %s177
    %s181 = sphi 0, %s180
    %s197 = sphi 0, %s181
  $region4: #{tpu_custom_call.1} parent=0 // loop_header_branch
    %18 = sbr.rel (%p16) target = $region8
  $region5: #{tpu_custom_call.1} parent=0 // loop_body
    %s20 = ssub.s32 %s15, 1
    %s21 = ssub.s32 %s15, 2
    %s22 = sadd.s32 %s15, 1
    %s23 = ssub.s32 %s15, %s22
    %p24 = scmp.eq.s32.totalorder %s23, 0
    %s26 = sadd.s32 %s25, 1
    %s27 = scalar_select %p24, %s25, %s26
    %p30 = pneg %p24
    %p31 = scmp.eq.s32.totalorder %s15, 3
    %p32 = por %p30, %p31
    %p33 = scmp.ne.s32.totalorder %s25, %s28
    %p34 = scmp.eq.s32.totalorder %s15, 0
    %p35 = por %p33, %p34
    %p36 = scmp.ne.s32.totalorder %s25, %s28
    %p37 = scmp.eq.s32.totalorder %s20, 3
    %p38 = por %p36, %p37
    %p39 = scmp.ne.s32.totalorder %s28, %s29
    %p40 = scmp.eq.s32.totalorder %s20, 0
    %p41 = por %p39, %p40
    %p42 = scmp.ne.s32.totalorder %s28, %s29
    %p43 = scmp.eq.s32.totalorder %s21, 3
    %p44 = por %p42, %p43
    %p46 = scmp.ne.s32.totalorder %s29, %s45
    %p47 = scmp.eq.s32.totalorder %s21, 0
    %p48 = por %p46, %p47
    %s50 = sadd.s32 %s49, 1
    %p53 = scmp.eq.s32.totalorder %s15, 3
    %p54 = scmp.ne.s32.totalorder %s49, %s51
    %p55 = scmp.eq.s32.totalorder %s15, 0
    %p56 = por %p54, %p55
    %p57 = scmp.ne.s32.totalorder %s49, %s51
    %p58 = scmp.eq.s32.totalorder %s20, 3
    %p59 = por %p57, %p58
    %p60 = scmp.ne.s32.totalorder %s51, %s52
    %p61 = scmp.eq.s32.totalorder %s20, 0
    %p62 = por %p60, %p61
    %p63 = scmp.ne.s32.totalorder %s51, %s52
    %p64 = scmp.eq.s32.totalorder %s21, 3
    %p65 = por %p63, %p64
    %p67 = scmp.ne.s32.totalorder %s52, %s66
    %p68 = scmp.eq.s32.totalorder %s21, 0
    %p69 = por %p67, %p68
    %s71 = sadd.s32 %s70, 1
    %p74 = scmp.eq.s32.totalorder %s15, 3
    %p75 = scmp.ne.s32.totalorder %s70, %s72
    %p76 = scmp.eq.s32.totalorder %s15, 0
    %p77 = por %p75, %p76
    %p78 = scmp.ne.s32.totalorder %s70, %s72
    %p79 = scmp.eq.s32.totalorder %s20, 3
    %p80 = por %p78, %p79
    %p81 = scmp.ne.s32.totalorder %s72, %s73
    %p82 = scmp.eq.s32.totalorder %s20, 0
    %p83 = por %p81, %p82
    %p84 = scmp.ne.s32.totalorder %s72, %s73
    %p85 = scmp.eq.s32.totalorder %s21, 3
    %p86 = por %p84, %p85
    %p88 = scmp.ne.s32.totalorder %s73, %s87
    %p89 = scmp.eq.s32.totalorder %s21, 0
    %p90 = por %p88, %p89
    %s92 = sadd.s32 %s91, 1
    %p95 = scmp.eq.s32.totalorder %s15, 3
    %p96 = scmp.ne.s32.totalorder %s91, %s93
    %p97 = scmp.eq.s32.totalorder %s15, 0
    %p98 = por %p96, %p97
    %p99 = scmp.ne.s32.totalorder %s91, %s93
    %p100 = scmp.eq.s32.totalorder %s20, 3
    %p101 = por %p99, %p100
    %p102 = scmp.ne.s32.totalorder %s93, %s94
    %p103 = scmp.eq.s32.totalorder %s20, 0
    %p104 = por %p102, %p103
    %p105 = scmp.ne.s32.totalorder %s93, %s94
    %p106 = scmp.eq.s32.totalorder %s21, 3
    %p107 = por %p105, %p106
    %p109 = scmp.ne.s32.totalorder %s94, %s108
    %p110 = scmp.eq.s32.totalorder %s21, 0
    %p111 = por %p109, %p110
    %s113 = sadd.s32 %s112, 1
    %p116 = scmp.eq.s32.totalorder %s15, 3
    %p117 = scmp.ne.s32.totalorder %s112, %s114
    %p118 = scmp.eq.s32.totalorder %s15, 0
    %p119 = por %p117, %p118
    %p120 = scmp.ne.s32.totalorder %s112, %s114
    %p121 = scmp.eq.s32.totalorder %s20, 3
    %p122 = por %p120, %p121
    %p123 = scmp.ne.s32.totalorder %s114, %s115
    %p124 = scmp.eq.s32.totalorder %s20, 0
    %p125 = por %p123, %p124
    %p126 = scmp.ne.s32.totalorder %s114, %s115
    %p127 = scmp.eq.s32.totalorder %s21, 3
    %p128 = por %p126, %p127
    %p130 = scmp.ne.s32.totalorder %s115, %s129
    %p131 = scmp.eq.s32.totalorder %s21, 0
    %p132 = por %p130, %p131
    %s134 = sadd.s32 %s133, 1
    %p137 = scmp.eq.s32.totalorder %s15, 3
    %p138 = scmp.ne.s32.totalorder %s133, %s135
    %p139 = scmp.eq.s32.totalorder %s15, 0
    %p140 = por %p138, %p139
    %p141 = scmp.ne.s32.totalorder %s133, %s135
    %p142 = scmp.eq.s32.totalorder %s20, 3
    %p143 = por %p141, %p142
    %p144 = scmp.ne.s32.totalorder %s135, %s136
    %p145 = scmp.eq.s32.totalorder %s20, 0
    %p146 = por %p144, %p145
    %p147 = scmp.ne.s32.totalorder %s135, %s136
    %p148 = scmp.eq.s32.totalorder %s21, 3
    %p149 = por %p147, %p148
    %p151 = scmp.ne.s32.totalorder %s136, %s150
    %p152 = scmp.eq.s32.totalorder %s21, 0
    %p153 = por %p151, %p152
    %s155 = sadd.s32 %s154, 1
    %p158 = scmp.eq.s32.totalorder %s15, 3
    %p159 = scmp.ne.s32.totalorder %s154, %s156
    %p160 = scmp.eq.s32.totalorder %s15, 0
    %p161 = por %p159, %p160
    %p162 = scmp.ne.s32.totalorder %s154, %s156
    %p163 = scmp.eq.s32.totalorder %s20, 3
    %p164 = por %p162, %p163
    %p165 = scmp.ne.s32.totalorder %s156, %s157
    %p166 = scmp.eq.s32.totalorder %s20, 0
    %p167 = por %p165, %p166
    %p168 = scmp.ne.s32.totalorder %s156, %s157
    %p169 = scmp.eq.s32.totalorder %s21, 3
    %p170 = por %p168, %p169
    %p172 = scmp.ne.s32.totalorder %s157, %s171
    %p173 = scmp.eq.s32.totalorder %s21, 0
    %p174 = por %p172, %p173
    %s175 = ssub.s32 %s15, %s22
    %p176 = scmp.eq.s32.totalorder %s175, 0
    %s178 = sadd.s32 %s177, 1
    %s179 = scalar_select %p176, %s177, %s178
    %p182 = pneg %p176
    %p183 = scmp.eq.s32.totalorder %s15, 3
    %p184 = por %p182, %p183
    %p185 = scmp.ne.s32.totalorder %s177, %s180
    %p186 = scmp.eq.s32.totalorder %s15, 0
    %p187 = por %p185, %p186
    %p188 = scmp.ne.s32.totalorder %s177, %s180
    %p189 = scmp.eq.s32.totalorder %s20, 3
    %p190 = por %p188, %p189
    %p191 = scmp.ne.s32.totalorder %s180, %s181
    %p192 = scmp.eq.s32.totalorder %s20, 0
    %p193 = por %p191, %p192
    %p194 = scmp.ne.s32.totalorder %s180, %s181
    %p195 = scmp.eq.s32.totalorder %s21, 3
    %p196 = por %p194, %p195
    %p198 = scmp.ne.s32.totalorder %s181, %s197
    %p199 = scmp.eq.s32.totalorder %s21, 0
    %p200 = por %p198, %p199
    %p201 = scmp.le.s32.totalorder 1, %s15
    %p202 = scmp.lt.s32.totalorder %s15, 5
    %p203 = pnand %p201, %p202
    %p204 = pneg %p203
    // Predicated region
    $region9: #{tpu_custom_call.1} parent=5 // pred_check
      _
    $region10: #{tpu_custom_call.1} parent=5 // pred_check_branch
      %206 = sbr.rel (%p203) target = $region12
    $region11: #{tpu_custom_call.1} parent=5 // pred_region
      %s207 = ssub.s32 %s15, 1
      // Predicated region
      $region13: #{tpu_custom_call.1} parent=11 // pred_check
        %p208 = pneg %p62
      $region14: #{tpu_custom_call.1} parent=11 // pred_check_branch
        %210 = sbr.rel (%p208) target = $region16
      $region15: #{tpu_custom_call.1} parent=11 // pred_region
        _
      $region16: #{tpu_custom_call.1} parent=11 // pred_fallthru
        _
      // Predicated region
      $region17: #{tpu_custom_call.1} parent=11 // pred_check
        %p211 = pneg %p83
      $region18: #{tpu_custom_call.1} parent=11 // pred_check_branch
        %213 = sbr.rel (%p211) target = $region20
      $region19: #{tpu_custom_call.1} parent=11 // pred_region
        _
      $region20: #{tpu_custom_call.1} parent=11 // pred_fallthru
        _
      // Predicated region
      $region21: #{tpu_custom_call.1} parent=11 // pred_check
        %p214 = pneg %p104
      $region22: #{tpu_custom_call.1} parent=11 // pred_check_branch
        %216 = sbr.rel (%p214) target = $region24
      $region23: #{tpu_custom_call.1} parent=11 // pred_region
        _
      $region24: #{tpu_custom_call.1} parent=11 // pred_fallthru
        _
      // Predicated region
      $region25: #{tpu_custom_call.1} parent=11 // pred_check
        %p217 = pneg %p125
      $region26: #{tpu_custom_call.1} parent=11 // pred_check_branch
        %219 = sbr.rel (%p217) target = $region28
      $region27: #{tpu_custom_call.1} parent=11 // pred_region
        _
      $region28: #{tpu_custom_call.1} parent=11 // pred_fallthru
        _
      // Predicated region
      $region29: #{tpu_custom_call.1} parent=11 // pred_check
        %p220 = pneg %p146
      $region30: #{tpu_custom_call.1} parent=11 // pred_check_branch
        %222 = sbr.rel (%p220) target = $region32
      $region31: #{tpu_custom_call.1} parent=11 // pred_region
        _
      $region32: #{tpu_custom_call.1} parent=11 // pred_fallthru
        _
      // Predicated region
      $region33: #{tpu_custom_call.1} parent=11 // pred_check
        %p223 = pneg %p167
      $region34: #{tpu_custom_call.1} parent=11 // pred_check_branch
        %225 = sbr.rel (%p223) target = $region36
      $region35: #{tpu_custom_call.1} parent=11 // pred_region
        _
      $region36: #{tpu_custom_call.1} parent=11 // pred_fallthru
        _
    $region12: #{tpu_custom_call.1} parent=5 // pred_fallthru
      _
    %p226 = scmp.lt.s32.totalorder %s15, 4
    // Predicated region
    $region37: #{tpu_custom_call.1} parent=5 // pred_check
      %p227 = pneg %p226
    $region38: #{tpu_custom_call.1} parent=5 // pred_check_branch
      %229 = sbr.rel (%p227) target = $region40
    $region39: #{tpu_custom_call.1} parent=5 // pred_region
      // Predicated region
      $region41: #{tpu_custom_call.1} parent=39 // pred_check
        %p230 = pneg %p35
      $region42: #{tpu_custom_call.1} parent=39 // pred_check_branch
        %232 = sbr.rel (%p230) target = $region44
      $region43: #{tpu_custom_call.1} parent=39 // pred_region
        %s233 = smul.u32 16, %s15
        %p234 = scmp.lt.s32.totalorder %s233, 63
        %s235 = scalar_select %p234, %s233, 63
        %s236 = smul.addr %s235, 4
        %s237 = scalar_lea.vmem %s0, %s236
        %s238 = smul.u32 16, %s15
      $region44: #{tpu_custom_call.1} parent=39 // pred_fallthru
        _
    $region40: #{tpu_custom_call.1} parent=5 // pred_fallthru
      _
    %p239 = scmp.le.s32.totalorder 1, %s15
    %p240 = scmp.lt.s32.totalorder %s15, 5
    %p241 = pnand %p239, %p240
    %p242 = pneg %p241
    // Predicated region
    $region45: #{tpu_custom_call.1} parent=5 // pred_check
      _
    $region46: #{tpu_custom_call.1} parent=5 // pred_check_branch
      %244 = sbr.rel (%p241) target = $region48
    $region47: #{tpu_custom_call.1} parent=5 // pred_region
      %s245 = ssub.s32 %s15, 1
      %s246 = smul.u32 16, %s20
      %p247 = scmp.lt.s32.totalorder %s246, 63
      %s248 = scalar_select %p247, %s246, 63
      %s249 = smul.addr %s248, 4
      %s250 = scalar_lea.vmem %s0, %s249
      %p251 = pneg %p41
      %p252 = pneg %p38
      %p253 = pneg %p62
      %p254 = pneg %p59
      %p255 = pneg %p83
      %p256 = pneg %p80
      %p257 = pneg %p104
      %p258 = pneg %p101
      %p259 = pneg %p125
      %p260 = pneg %p122
      %p261 = pneg %p146
      %p262 = pneg %p143
      %p263 = pneg %p167
      %p264 = pneg %p164
      %p265 = pneg %p193
      %p266 = pneg %p190
      %s267 = smul.u32 16, %s20
      %p268 = scmp.lt.s32.totalorder %s267, 63
      %s269 = scalar_select %p268, %s267, 63
      %s270 = smul.addr %s269, 8
      %s271 = scalar_lea.vmem %s7, %s270
      %s272 = smul.u32 16, %s20
      %p273 = scmp.lt.s32.totalorder %s272, 63
      %s274 = scalar_select %p273, %s272, 63
      %s275 = smul.addr %s274, 4
      %s276 = scalar_lea.vmem %s0, %s275
      %s277 = smul.u32 16, %s20
      %s278 = smul.u32 16, %s20
      %p279 = scmp.lt.s32.totalorder %s278, 63
      %s280 = scalar_select %p279, %s278, 63
      %s281 = smul.addr %s280, 8
      %s282 = scalar_lea.vmem %s7, %s281
      %s283 = smul.u32 16, %s20
      %v285 = vld [vmem:[%s276] sm:$0xf]
      %v286 = vld [vmem:[%s276 + $0x4] sm:$0xf]
      %v287 = vld [vmem:[%s276 + $0x8] sm:$0xf]
      %v288 = vld [vmem:[%s276 + $0xc] sm:$0xf]
      %v289 = vld [vmem:[%s276 + $0x10] sm:$0xf]
      %v290 = vld [vmem:[%s276 + $0x14] sm:$0xf]
      %v291 = vld [vmem:[%s276 + $0x18] sm:$0xf]
      %v292 = vld [vmem:[%s276 + $0x1c] sm:$0xf]
      %v293 = vld [vmem:[%s276 + $0x20] sm:$0xf]
      %v294 = vld [vmem:[%s276 + $0x24] sm:$0xf]
      %v295 = vld [vmem:[%s276 + $0x28] sm:$0xf]
      %v296 = vld [vmem:[%s276 + $0x2c] sm:$0xf]
      %v297 = vld [vmem:[%s276 + $0x30] sm:$0xf]
      %v298 = vld [vmem:[%s276 + $0x34] sm:$0xf]
      %v299 = vld [vmem:[%s276 + $0x38] sm:$0xf]
      %v300 = vld [vmem:[%s276 + $0x3c] sm:$0xf]
      %v301 = vld [vmem:[%s1] sm:$0xf]
      %v302 = vld [vmem:[%s1 + $0x4] sm:$0xf]
      %v303 = vld [vmem:[%s1 + $0x8] sm:$0xf]
      %v304 = vld [vmem:[%s1 + $0xc] sm:$0xf]
      %v305 = vld [vmem:[%s2] sm:$0x1]
      %v307 = vlaneseq
      %v308 = vshrl.u32 %v307, 7
      %v309 = vsub.s32 0, %v308
      %v310 = vrot.slane %v305, %v309
      %v328 = vunpack.c.l.b16 %v285
      %v329 = vunpack.c.l.b16 %v286
      %v330 = vunpack.c.l.b16 %v287
      %v331 = vunpack.c.l.b16 %v288
      %v332 = vunpack.c.l.b16 %v289
      %v333 = vunpack.c.l.b16 %v290
      %v334 = vunpack.c.l.b16 %v291
      %v335 = vunpack.c.l.b16 %v292
      %v336 = vunpack.c.l.b16 %v293
      %v337 = vunpack.c.l.b16 %v294
      %v338 = vunpack.c.l.b16 %v295
      %v339 = vunpack.c.l.b16 %v296
      %v340 = vunpack.c.l.b16 %v297
      %v341 = vunpack.c.l.b16 %v298
      %v342 = vunpack.c.l.b16 %v299
      %v343 = vunpack.c.l.b16 %v300
      %v344 = vpack.c.b16 %v329, %v328
      %v345 = vpack.c.b16 %v331, %v330
      %v346 = vpack.c.b16 %v333, %v332
      %v347 = vpack.c.b16 %v335, %v334
      %v348 = vpack.c.b16 %v337, %v336
      %v349 = vpack.c.b16 %v339, %v338
      %v350 = vpack.c.b16 %v341, %v340
      %v351 = vpack.c.b16 %v343, %v342
      %v356 = vunpack.c.l.b16 %v301
      %v357 = vunpack.c.l.b16 %v302
      %v358 = vunpack.c.l.b16 %v303
      %v359 = vunpack.c.l.b16 %v304
      %v360 = vpack.c.b16 %v357, %v356
      %v361 = vpack.c.b16 %v359, %v358
      %vm364 = vcmask 261120
      %v366 = vsel %vm364, %v344, 0
      %v369 = vsel %vm364, %v345, 0
      %v372 = vsel %vm364, %v346, 0
      %v375 = vsel %vm364, %v347, 0
      %v378 = vsel %vm364, %v348, 0
      %v381 = vsel %vm364, %v349, 0
      %v384 = vsel %vm364, %v350, 0
      %v387 = vsel %vm364, %v351, 0
      %389 = vmatprep.subr.bf16.mxu0 0
      %390 = vmatpush1.bf16.msra.mxu0 0
      %391 = vmatprep.subr.bf16.mxu0 0
      %392 = vmatpush1.bf16.msra.mxu0 0
      %393 = vmatprep.subr.bf16.mxu0 0
      %394 = vmatpush1.bf16.msra.mxu0 0
      %395 = vmatprep.subr.bf16.mxu0 0
      %396 = vmatpush1.bf16.msra.mxu0 0
      %397 = vmatprep.subr.bf16.mxu0 0
      %398 = vmatpush1.bf16.msra.mxu0 0
      %399 = vmatprep.subr.bf16.mxu0 0
      %400 = vmatpush1.bf16.msra.mxu0 0
      %401 = vmatprep.subr.bf16.mxu0 0
      %402 = vmatpush1.bf16.msra.mxu0 %v361
      %403 = vmatprep.subr.bf16.mxu0 0
      %404 = vmatpush1.bf16.msra.mxu0 %v360
      %405 = vmatprep.subr.bf16.mxu0 0
      %406 = vmatpush2.bf16.msra.mxu0 0
      %407 = vmatprep.subr.bf16.mxu0 0
      %408 = vmatpush2.bf16.msra.mxu0 0
      %409 = vmatprep.subr.bf16.mxu0 0
      %410 = vmatpush2.bf16.msra.mxu0 0
      %411 = vmatprep.subr.bf16.mxu0 0
      %412 = vmatpush2.bf16.msra.mxu0 0
      %413 = vmatprep.subr.bf16.mxu0 0
      %414 = vmatpush2.bf16.msra.mxu0 0
      %415 = vmatprep.subr.bf16.mxu0 0
      %416 = vmatpush2.bf16.msra.mxu0 0
      %417 = vmatprep.subr.bf16.mxu0 0
      %418 = vmatpush2.bf16.msra.mxu0 0
      %419 = vmatprep.subr.bf16.mxu0 0
      %420 = vmatpush2.bf16.msra.mxu0 0
      %421 = vmatprep.mubr.bf16.mxu0 0
      %422 = vmatmul.mubr.bf16.gmra.mxu0 %v366
      %v423 = vpop.f32.mrf.mxu0
      %v424 = vadd.f32 %v310, %v423
      %v425 = vpop.f32.mrf.mxu0
      %v426 = vpop.f32.mrf.mxu0
      %v427 = vadd.f32 %v310, %v426
      %v428 = vpop.f32.mrf.mxu0
      %429 = vmatprep.mubr.bf16.mxu0 0
      %430 = vmatmul.mubr.bf16.gmra.mxu0 %v369
      %v431 = vpop.f32.mrf.mxu0
      %v432 = vadd.f32 %v310, %v431
      %v433 = vpop.f32.mrf.mxu0
      %v434 = vpop.f32.mrf.mxu0
      %v435 = vadd.f32 %v310, %v434
      %v436 = vpop.f32.mrf.mxu0
      %437 = vmatprep.mubr.bf16.mxu0 0
      %438 = vmatmul.mubr.bf16.gmra.mxu0 %v372
      %v439 = vpop.f32.mrf.mxu0
      %v440 = vadd.f32 %v310, %v439
      %v441 = vpop.f32.mrf.mxu0
      %v442 = vpop.f32.mrf.mxu0
      %v443 = vadd.f32 %v310, %v442
      %v444 = vpop.f32.mrf.mxu0
      %445 = vmatprep.mubr.bf16.mxu0 0
      %446 = vmatmul.mubr.bf16.gmra.mxu0 %v375
      %v447 = vpop.f32.mrf.mxu0
      %v448 = vadd.f32 %v310, %v447
      %v449 = vpop.f32.mrf.mxu0
      %v450 = vpop.f32.mrf.mxu0
      %v451 = vadd.f32 %v310, %v450
      %v452 = vpop.f32.mrf.mxu0
      %453 = vmatprep.mubr.bf16.mxu0 0
      %454 = vmatmul.mubr.bf16.gmra.mxu0 %v378
      %v455 = vpop.f32.mrf.mxu0
      %v456 = vadd.f32 %v310, %v455
      %v457 = vpop.f32.mrf.mxu0
      %v458 = vpop.f32.mrf.mxu0
      %v459 = vadd.f32 %v310, %v458
      %v460 = vpop.f32.mrf.mxu0
      %461 = vmatprep.mubr.bf16.mxu0 0
      %462 = vmatmul.mubr.bf16.gmra.mxu0 %v381
      %v463 = vpop.f32.mrf.mxu0
      %v464 = vadd.f32 %v310, %v463
      %v465 = vpop.f32.mrf.mxu0
      %v466 = vpop.f32.mrf.mxu0
      %v467 = vadd.f32 %v310, %v466
      %v468 = vpop.f32.mrf.mxu0
      %469 = vmatprep.mubr.bf16.mxu0 0
      %470 = vmatmul.mubr.bf16.gmra.mxu0 %v384
      %v471 = vpop.f32.mrf.mxu0
      %v472 = vadd.f32 %v310, %v471
      %v473 = vpop.f32.mrf.mxu0
      %v474 = vpop.f32.mrf.mxu0
      %v475 = vadd.f32 %v310, %v474
      %v476 = vpop.f32.mrf.mxu0
      %477 = vmatprep.mubr.bf16.mxu0 0
      %478 = vmatmul.mubr.bf16.gmra.mxu0 %v387
      %v479 = vpop.f32.mrf.mxu0
      %v480 = vadd.f32 %v310, %v479
      %v481 = vpop.f32.mrf.mxu0
      %v482 = vpop.f32.mrf.mxu0
      %v483 = vadd.f32 %v310, %v482
      %v484 = vpop.f32.mrf.mxu0
      %485 = vdwg.mxu0
      %v486 = vmax.f32 %v424, 0.0
      %v487 = vmax.f32 %v427, 0.0
      %v488 = vmax.f32 %v432, 0.0
      %v489 = vmax.f32 %v435, 0.0
      %v490 = vmax.f32 %v440, 0.0
      %v491 = vmax.f32 %v443, 0.0
      %v492 = vmax.f32 %v448, 0.0
      %v493 = vmax.f32 %v451, 0.0
      %v494 = vmax.f32 %v456, 0.0
      %v495 = vmax.f32 %v459, 0.0
      %v496 = vmax.f32 %v464, 0.0
      %v497 = vmax.f32 %v467, 0.0
      %v498 = vmax.f32 %v472, 0.0
      %v499 = vmax.f32 %v475, 0.0
      %v500 = vmax.f32 %v480, 0.0
      %v501 = vmax.f32 %v483, 0.0
      %v502 = vpack.c.bf16 %v487, %v486
      %v503 = vpack.c.bf16 %v489, %v488
      %v504 = vpack.c.bf16 %v491, %v490
      %v505 = vpack.c.bf16 %v493, %v492
      %v506 = vpack.c.bf16 %v495, %v494
      %v507 = vpack.c.bf16 %v497, %v496
      %v508 = vpack.c.bf16 %v499, %v498
      %v509 = vpack.c.bf16 %v501, %v500
      %v510 = vld [vmem:[%s3] sm:$0xf]
      %v511 = vld [vmem:[%s3 + $0x4] sm:$0xf]
      %v512 = vld [vmem:[%s3 + $0x8] sm:$0xf]
      %v513 = vld [vmem:[%s3 + $0xc] sm:$0xf]
      %v514 = vld [vmem:[%s3 + $0x10] sm:$0xf]
      %v515 = vld [vmem:[%s3 + $0x14] sm:$0xf]
      %v516 = vld [vmem:[%s3 + $0x18] sm:$0xf]
      %v517 = vld [vmem:[%s3 + $0x1c] sm:$0xf]
      %v518 = vld [vmem:[%s4] sm:$0x1]
      %v520 = vlaneseq
      %v521 = vshrl.u32 %v520, 7
      %v522 = vsub.s32 0, %v521
      %v523 = vrot.slane %v518, %v522
      %v533 = vunpack.c.l.b16 %v510
      %v534 = vunpack.c.l.b16 %v511
      %v535 = vunpack.c.l.b16 %v512
      %v536 = vunpack.c.l.b16 %v513
      %v537 = vunpack.c.l.b16 %v514
      %v538 = vunpack.c.l.b16 %v515
      %v539 = vunpack.c.l.b16 %v516
      %v540 = vunpack.c.l.b16 %v517
      %v541 = vpack.c.b16 %v534, %v533
      %v542 = vpack.c.b16 %v536, %v535
      %v543 = vpack.c.b16 %v538, %v537
      %v544 = vpack.c.b16 %v540, %v539
      %vm549 = vcmask 523264
      %v551 = vsel %vm549, %v502, 0
      %v554 = vsel %vm549, %v503, 0
      %v557 = vsel %vm549, %v504, 0
      %v560 = vsel %vm549, %v505, 0
      %v563 = vsel %vm549, %v506, 0
      %v566 = vsel %vm549, %v507, 0
      %v569 = vsel %vm549, %v508, 0
      %v572 = vsel %vm549, %v509, 0
      %574 = vmatprep.subr.bf16.mxu0 0
      %575 = vmatpush1.bf16.msra.mxu0 0
      %576 = vmatprep.subr.bf16.mxu0 0
      %577 = vmatpush1.bf16.msra.mxu0 0
      %578 = vmatprep.subr.bf16.mxu0 0
      %579 = vmatpush1.bf16.msra.mxu0 0
      %580 = vmatprep.subr.bf16.mxu0 0
      %581 = vmatpush1.bf16.msra.mxu0 0
      %582 = vmatprep.subr.bf16.mxu0 0
      %583 = vmatpush1.bf16.msra.mxu0 %v544
      %584 = vmatprep.subr.bf16.mxu0 0
      %585 = vmatpush1.bf16.msra.mxu0 %v543
      %586 = vmatprep.subr.bf16.mxu0 0
      %587 = vmatpush1.bf16.msra.mxu0 %v542
      %588 = vmatprep.subr.bf16.mxu0 0
      %589 = vmatpush1.bf16.msra.mxu0 %v541
      %590 = vmatprep.subr.bf16.mxu0 0
      %591 = vmatpush2.bf16.msra.mxu0 0
      %592 = vmatprep.subr.bf16.mxu0 0
      %593 = vmatpush2.bf16.msra.mxu0 0
      %594 = vmatprep.subr.bf16.mxu0 0
      %595 = vmatpush2.bf16.msra.mxu0 0
      %596 = vmatprep.subr.bf16.mxu0 0
      %597 = vmatpush2.bf16.msra.mxu0 0
      %598 = vmatprep.subr.bf16.mxu0 0
      %599 = vmatpush2.bf16.msra.mxu0 0
      %600 = vmatprep.subr.bf16.mxu0 0
      %601 = vmatpush2.bf16.msra.mxu0 0
      %602 = vmatprep.subr.bf16.mxu0 0
      %603 = vmatpush2.bf16.msra.mxu0 0
      %604 = vmatprep.subr.bf16.mxu0 0
      %605 = vmatpush2.bf16.msra.mxu0 0
      %606 = vmatprep.mubr.bf16.mxu0 0
      %607 = vmatmul.mubr.bf16.gmra.mxu0 %v551
      %v608 = vpop.f32.mrf.mxu0
      %v609 = vadd.f32 %v523, %v608
      %v610 = vpop.f32.mrf.mxu0
      %v611 = vpop.f32.mrf.mxu0
      %v612 = vadd.f32 %v523, %v611
      %v613 = vpop.f32.mrf.mxu0
      %614 = vmatprep.mubr.bf16.mxu0 0
      %615 = vmatmul.mubr.bf16.gmra.mxu0 %v554
      %v616 = vpop.f32.mrf.mxu0
      %v617 = vadd.f32 %v523, %v616
      %v618 = vpop.f32.mrf.mxu0
      %v619 = vpop.f32.mrf.mxu0
      %v620 = vadd.f32 %v523, %v619
      %v621 = vpop.f32.mrf.mxu0
      %622 = vmatprep.mubr.bf16.mxu0 0
      %623 = vmatmul.mubr.bf16.gmra.mxu0 %v557
      %v624 = vpop.f32.mrf.mxu0
      %v625 = vadd.f32 %v523, %v624
      %v626 = vpop.f32.mrf.mxu0
      %v627 = vpop.f32.mrf.mxu0
      %v628 = vadd.f32 %v523, %v627
      %v629 = vpop.f32.mrf.mxu0
      %630 = vmatprep.mubr.bf16.mxu0 0
      %631 = vmatmul.mubr.bf16.gmra.mxu0 %v560
      %v632 = vpop.f32.mrf.mxu0
      %v633 = vadd.f32 %v523, %v632
      %v634 = vpop.f32.mrf.mxu0
      %v635 = vpop.f32.mrf.mxu0
      %v636 = vadd.f32 %v523, %v635
      %v637 = vpop.f32.mrf.mxu0
      %638 = vmatprep.mubr.bf16.mxu0 0
      %639 = vmatmul.mubr.bf16.gmra.mxu0 %v563
      %v640 = vpop.f32.mrf.mxu0
      %v641 = vadd.f32 %v523, %v640
      %v642 = vpop.f32.mrf.mxu0
      %v643 = vpop.f32.mrf.mxu0
      %v644 = vadd.f32 %v523, %v643
      %v645 = vpop.f32.mrf.mxu0
      %646 = vmatprep.mubr.bf16.mxu0 0
      %647 = vmatmul.mubr.bf16.gmra.mxu0 %v566
      %v648 = vpop.f32.mrf.mxu0
      %v649 = vadd.f32 %v523, %v648
      %v650 = vpop.f32.mrf.mxu0
      %v651 = vpop.f32.mrf.mxu0
      %v652 = vadd.f32 %v523, %v651
      %v653 = vpop.f32.mrf.mxu0
      %654 = vmatprep.mubr.bf16.mxu0 0
      %655 = vmatmul.mubr.bf16.gmra.mxu0 %v569
      %v656 = vpop.f32.mrf.mxu0
      %v657 = vadd.f32 %v523, %v656
      %v658 = vpop.f32.mrf.mxu0
      %v659 = vpop.f32.mrf.mxu0
      %v660 = vadd.f32 %v523, %v659
      %v661 = vpop.f32.mrf.mxu0
      %662 = vmatprep.mubr.bf16.mxu0 0
      %663 = vmatmul.mubr.bf16.gmra.mxu0 %v572
      %v664 = vpop.f32.mrf.mxu0
      %v665 = vadd.f32 %v523, %v664
      %v666 = vpop.f32.mrf.mxu0
      %v667 = vpop.f32.mrf.mxu0
      %v668 = vadd.f32 %v523, %v667
      %v669 = vpop.f32.mrf.mxu0
      %670 = vdwg.mxu0
      %v671 = vmax.f32 %v609, 0.0
      %v672 = vmax.f32 %v612, 0.0
      %v673 = vmax.f32 %v617, 0.0
      %v674 = vmax.f32 %v620, 0.0
      %v675 = vmax.f32 %v625, 0.0
      %v676 = vmax.f32 %v628, 0.0
      %v677 = vmax.f32 %v633, 0.0
      %v678 = vmax.f32 %v636, 0.0
      %v679 = vmax.f32 %v641, 0.0
      %v680 = vmax.f32 %v644, 0.0
      %v681 = vmax.f32 %v649, 0.0
      %v682 = vmax.f32 %v652, 0.0
      %v683 = vmax.f32 %v657, 0.0
      %v684 = vmax.f32 %v660, 0.0
      %v685 = vmax.f32 %v665, 0.0
      %v686 = vmax.f32 %v668, 0.0
      %v687 = vld [vmem:[%s5] sm:$0x1]
      %v689 = vlaneseq
      %v690 = vshrl.u32 %v689, 7
      %v691 = vsub.s32 0, %v690
      %v692 = vrot.slane %v687, %v691
      %v694 = vmul.f32 %v671, %v692
      %v695 = vmul.f32 %v672, %v692
      %v696 = vmul.f32 %v673, %v692
      %v697 = vmul.f32 %v674, %v692
      %v698 = vmul.f32 %v675, %v692
      %v699 = vmul.f32 %v676, %v692
      %v700 = vmul.f32 %v677, %v692
      %v701 = vmul.f32 %v678, %v692
      %v702 = vmul.f32 %v679, %v692
      %v703 = vmul.f32 %v680, %v692
      %v704 = vmul.f32 %v681, %v692
      %v705 = vmul.f32 %v682, %v692
      %v706 = vmul.f32 %v683, %v692
      %v707 = vmul.f32 %v684, %v692
      %v708 = vmul.f32 %v685, %v692
      %v709 = vmul.f32 %v686, %v692
      %v710 = vsel %vm364, %v694, 0.0
      %711 = vadd.xlane.f32.xlu0 %v710
      %v712 = vpop.xlane.xlu0 %711
      %v713 = vsel %vm364, %v695, 0.0
      %714 = vadd.xlane.f32.xlu0 %v713
      %v715 = vpop.xlane.xlu0 %714
      %v716 = vsel %vm364, %v696, 0.0
      %717 = vadd.xlane.f32.xlu0 %v716
      %v718 = vpop.xlane.xlu0 %717
      %v719 = vsel %vm364, %v697, 0.0
      %720 = vadd.xlane.f32.xlu0 %v719
      %v721 = vpop.xlane.xlu0 %720
      %v722 = vsel %vm364, %v698, 0.0
      %723 = vadd.xlane.f32.xlu0 %v722
      %v724 = vpop.xlane.xlu0 %723
      %v725 = vsel %vm364, %v699, 0.0
      %726 = vadd.xlane.f32.xlu0 %v725
      %v727 = vpop.xlane.xlu0 %726
      %v728 = vsel %vm364, %v700, 0.0
      %729 = vadd.xlane.f32.xlu0 %v728
      %v730 = vpop.xlane.xlu0 %729
      %v731 = vsel %vm364, %v701, 0.0
      %732 = vadd.xlane.f32.xlu0 %v731
      %v733 = vpop.xlane.xlu0 %732
      %v734 = vsel %vm364, %v702, 0.0
      %735 = vadd.xlane.f32.xlu0 %v734
      %v736 = vpop.xlane.xlu0 %735
      %v737 = vsel %vm364, %v703, 0.0
      %738 = vadd.xlane.f32.xlu0 %v737
      %v739 = vpop.xlane.xlu0 %738
      %v740 = vsel %vm364, %v704, 0.0
      %741 = vadd.xlane.f32.xlu0 %v740
      %v742 = vpop.xlane.xlu0 %741
      %v743 = vsel %vm364, %v705, 0.0
      %744 = vadd.xlane.f32.xlu0 %v743
      %v745 = vpop.xlane.xlu0 %744
      %v746 = vsel %vm364, %v706, 0.0
      %747 = vadd.xlane.f32.xlu0 %v746
      %v748 = vpop.xlane.xlu0 %747
      %v749 = vsel %vm364, %v707, 0.0
      %750 = vadd.xlane.f32.xlu0 %v749
      %v751 = vpop.xlane.xlu0 %750
      %v752 = vsel %vm364, %v708, 0.0
      %753 = vadd.xlane.f32.xlu0 %v752
      %v754 = vpop.xlane.xlu0 %753
      %v755 = vsel %vm364, %v709, 0.0
      %756 = vadd.xlane.f32.xlu0 %v755
      %v757 = vpop.xlane.xlu0 %756
      %v758 = vld [vmem:[#allocation2] sm:$0x1]
      %v760 = vlaneseq
      %v761 = vshrl.u32 %v760, 7
      %v762 = vsub.s32 0, %v761
      %v763 = vrot.slane %v758, %v762
      %v765 = vadd.f32 %v712, %v763
      %v766 = vadd.f32 %v715, %v763
      %v767 = vadd.f32 %v718, %v763
      %v768 = vadd.f32 %v721, %v763
      %v769 = vadd.f32 %v724, %v763
      %v770 = vadd.f32 %v727, %v763
      %v771 = vadd.f32 %v730, %v763
      %v772 = vadd.f32 %v733, %v763
      %v773 = vadd.f32 %v736, %v763
      %v774 = vadd.f32 %v739, %v763
      %v775 = vadd.f32 %v742, %v763
      %v776 = vadd.f32 %v745, %v763
      %v777 = vadd.f32 %v748, %v763
      %v778 = vadd.f32 %v751, %v763
      %v779 = vadd.f32 %v754, %v763
      %v780 = vadd.f32 %v757, %v763
      %vm781 = vcmask 7168
      %782 = vst.msk [vmem:[%s282] sm:$0xff] %vm781, %v765
      %783 = vst.msk [vmem:[%s282 + $0x8] sm:$0xff] %vm781, %v766
      %784 = vst.msk [vmem:[%s282 + $0x10] sm:$0xff] %vm781, %v767
      %785 = vst.msk [vmem:[%s282 + $0x18] sm:$0xff] %vm781, %v768
      %786 = vst.msk [vmem:[%s282 + $0x20] sm:$0xff] %vm781, %v769
      %787 = vst.msk [vmem:[%s282 + $0x28] sm:$0xff] %vm781, %v770
      %788 = vst.msk [vmem:[%s282 + $0x30] sm:$0xff] %vm781, %v771
      %789 = vst.msk [vmem:[%s282 + $0x38] sm:$0xff] %vm781, %v772
      %790 = vst.msk [vmem:[%s282 + $0x40] sm:$0xff] %vm781, %v773
      %791 = vst.msk [vmem:[%s282 + $0x48] sm:$0xff] %vm781, %v774
      %792 = vst.msk [vmem:[%s282 + $0x50] sm:$0xff] %vm781, %v775
      %793 = vst.msk [vmem:[%s282 + $0x58] sm:$0xff] %vm781, %v776
      %794 = vst.msk [vmem:[%s282 + $0x60] sm:$0xff] %vm781, %v777
      %795 = vst.msk [vmem:[%s282 + $0x68] sm:$0xff] %vm781, %v778
      %796 = vst.msk [vmem:[%s282 + $0x70] sm:$0xff] %vm781, %v779
      %797 = vst.msk [vmem:[%s282 + $0x78] sm:$0xff] %vm781, %v780
      %s798 = smul.u32 16, %s20
      %p799 = scmp.lt.s32.totalorder %s798, 63
      %s800 = scalar_select %p799, %s798, 63
      %s801 = smul.addr %s800, 8
      %s802 = scalar_lea.vmem %s7, %s801
      // Predicated region
      $region49: #{tpu_custom_call.1} parent=47 // pred_check
        %p803 = pneg %p190
      $region50: #{tpu_custom_call.1} parent=47 // pred_check_branch
        %805 = sbr.rel (%p803) target = $region52
      $region51: #{tpu_custom_call.1} parent=47 // pred_region
        %s806 = smul.u32 16, %s20
      $region52: #{tpu_custom_call.1} parent=47 // pred_fallthru
        _
    $region48: #{tpu_custom_call.1} parent=5 // pred_fallthru
      _
    %p807 = scmp.le.s32.totalorder 2, %s15
    // Predicated region
    $region53: #{tpu_custom_call.1} parent=5 // pred_check
      %p808 = pneg %p807
    $region54: #{tpu_custom_call.1} parent=5 // pred_check_branch
      %810 = sbr.rel (%p808) target = $region56
    $region55: #{tpu_custom_call.1} parent=5 // pred_region
      %s811 = ssub.s32 %s15, 2
      // Predicated region
      $region57: #{tpu_custom_call.1} parent=55 // pred_check
        %p812 = pneg %p196
      $region58: #{tpu_custom_call.1} parent=55 // pred_check_branch
        %814 = sbr.rel (%p812) target = $region60
      $region59: #{tpu_custom_call.1} parent=55 // pred_region
        %s815 = smul.u32 16, %s21
        %p816 = scmp.lt.s32.totalorder %s815, 63
        %s817 = scalar_select %p816, %s815, 63
        %s818 = smul.addr %s817, 8
        %s819 = scalar_lea.vmem %s7, %s818
      $region60: #{tpu_custom_call.1} parent=55 // pred_fallthru
        _
    $region56: #{tpu_custom_call.1} parent=5 // pred_fallthru
      _
  $region6: #{tpu_custom_call.1} parent=0 // loop_footer
    %s19 = sadd.s32 1, %s15
  $region7: #{tpu_custom_call.1} parent=0 // loop_footer_branch
    %14 = sbr.rel target = $region3
  $region8: #{tpu_custom_call.1} parent=0 // loop_exit
    _

</llo_original>
